<compile_context>
chip_gen: v5e
topology: v5e:2x2
jax: 0.10.0
libtpu: 0.0.40
codegen_flags: <defaults>
</compile_context>

<pallas_src>
import functools

import jax
import jax.numpy as jnp
from jax.experimental import pallas as pl
from jax.experimental.pallas import tpu as pltpu


def _round_up(x, m):
    return ((x + m - 1) // m) * m


# ---------------------------------------------------------------------------
# Pallas kernel: in-VMEM im2col + single MXU matmul + BN (f32) + ReLU -> bf16
# ---------------------------------------------------------------------------
def _conv_bn_relu_kernel(x_ref, w_ref, scale_ref, bias_ref, o_ref, rhs_ref,
                         *, shifts, cin_p):
    # x_ref:     (1, Cin_p, r_in)   bf16  flattened padded CHW image (resident)
    # w_ref:     (tco, K_p)         bf16  weight with taps folded into K
    # scale_ref: (tco, 1)           f32   BN scale = gamma / sqrt(var + eps)
    # bias_ref:  (tco, 1)           f32   BN bias  = beta - mean * scale
    # o_ref:     (1, tco, r_lane)   bf16  CHW output rows (overcomplete in W)
    # rhs_ref:   (K_p, r_lane)      bf16  VMEM scratch (in-VMEM im2col block)
    r_lane = rhs_ref.shape[1]

    # Assemble the (k*k*Cin_p, r_lane) im2col block from k*k lane-shifted views
    # of the single resident input block; shifts are static Python ints.
    for idx, s in enumerate(shifts):
        rhs_ref[pl.ds(idx * cin_p, cin_p), :] = x_ref[0, :, pl.ds(s, r_lane)]

    # One MXU matmul, K = k*k*Cin_p, f32 accumulation.
    acc = jnp.dot(w_ref[...], rhs_ref[...], preferred_element_type=jnp.float32)

    # Eval-mode BN applied in f32 on the accumulator (precision) + ReLU.
    y = acc * scale_ref[...] + bias_ref[...]
    o_ref[0] = jnp.maximum(y, 0.0).astype(o_ref.dtype)


# ---------------------------------------------------------------------------
# Wrapper: NCHW (stays channels-first) -> Pallas kernel -> NCHW
# ---------------------------------------------------------------------------
def conv2d_bn_activ(x_nchw, weight, gamma, beta, running_mean, running_var,
                    *, stride=1, padding=0, eps=1e-5):
    """Conv2d(bias=False) -> BatchNorm2d(eval, running stats) -> ReLU."""
    N, Cin, H, W = x_nchw.shape
    Cout, Cin_w, kh, kw = weight.shape
    assert Cin == Cin_w and kh == kw
    k = kh

    H_out = (H + 2 * padding - k) // stride + 1
    W_out = (W + 2 * padding - k) // stride + 1
    Hp, Wp = H + 2 * padding, W + 2 * padding
    H1, W1 = Hp - k + 1, Wp - k + 1          # stride-1 output extents

    Cin_p = _round_up(Cin, 16)               # bf16 sublane-tile aligned taps
    Cout_p = _round_up(Cout, 8)              # output sublane pad only (8, not 128)
    K_p = k * k * Cin_p                      # folded contraction depth

    r_out = H1 * Wp                          # overcomplete output rows / image
    r_lane = _round_up(r_out, 128)           # lane-dense output width
    max_shift = (k - 1) * Wp + (k - 1)
    r_in = _round_up(r_lane + max_shift, 128)  # covers every shifted lane read

    # ---- input: spatial pad, flatten HW to the lane dim, pad C & lanes ------
    x = x_nchw.astype(jnp.bfloat16)
    xp = jnp.pad(x, ((0, 0), (0, 0), (padding, padding), (padding, padding)))
    x_flat = xp.reshape(N, Cin, Hp * Wp)
    x_flat = jnp.pad(x_flat, ((0, 0), (0, Cin_p - Cin), (0, r_in - Hp * Wp)))

    # ---- weight: (Cout, Cin, k, k) -> (Cout_p, k*k*Cin_p), taps along K ------
    w_t = jnp.transpose(weight, (0, 2, 3, 1)).reshape(Cout, k * k, Cin)
    w_t = jnp.pad(w_t, ((0, Cout_p - Cout), (0, 0), (0, Cin_p - Cin)))
    w_mat = w_t.reshape(Cout_p, K_p).astype(jnp.bfloat16)

    # ---- eval-mode BN folded into per-channel f32 scale / bias --------------
    scale = gamma / jnp.sqrt(running_var + eps)              # (Cout,)
    bias = beta - running_mean * scale                       # (Cout,)
    scale_p = jnp.pad(scale, (0, Cout_p - Cout)).reshape(Cout_p, 1).astype(jnp.float32)
    bias_p = jnp.pad(bias, (0, Cout_p - Cout)).reshape(Cout_p, 1).astype(jnp.float32)

    # Cout block size (single block for typical layer widths).
    if Cout_p <= 512:
        tco = Cout_p
    elif Cout_p % 256 == 0:
        tco = 256
    elif Cout_p % 128 == 0:
        tco = 128
    else:
        tco = Cout_p

    shifts = tuple(ki * Wp + kj for ki in range(k) for kj in range(k))
    kernel = functools.partial(_conv_bn_relu_kernel, shifts=shifts, cin_p=Cin_p)

    # Raise the scoped-VMEM limit only if whole-image blocks need it.
    bpe = 2  # bf16
    est_bytes = (2 * (Cin_p * r_in * bpe + tco * K_p * bpe + tco * r_lane * bpe
                      + 2 * tco * 128 * 4)
                 + K_p * r_lane * bpe)
    vmem_limit = None
    if est_bytes > 32 * 1024 * 1024:
        vmem_limit = min(int(est_bytes * 1.25), 100 * 1024 * 1024)

    out_p = pl.pallas_call(
        kernel,
        out_shape=jax.ShapeDtypeStruct((N, Cout_p, r_lane), jnp.bfloat16),
        grid_spec=pltpu.PrefetchScalarGridSpec(
            num_scalar_prefetch=0,
            grid=(N, Cout_p // tco),
            in_specs=[
                pl.BlockSpec((1, Cin_p, r_in), lambda n, j: (n, 0, 0)),
                pl.BlockSpec((tco, K_p), lambda n, j: (j, 0)),
                pl.BlockSpec((tco, 1), lambda n, j: (j, 0)),
                pl.BlockSpec((tco, 1), lambda n, j: (j, 0)),
            ],
            out_specs=pl.BlockSpec((1, tco, r_lane), lambda n, j: (n, j, 0)),
            scratch_shapes=[pltpu.VMEM((K_p, r_lane), jnp.bfloat16)],
        ),
        compiler_params=pltpu.CompilerParams(
            dimension_semantics=("parallel", "parallel"),
            vmem_limit_bytes=vmem_limit),
    )(x_flat, w_mat, scale_p, bias_p)

    # (N, Cout_p, r_lane) -> drop pads, reshape to (N, Cout, H1, Wp), subsample.
    out = out_p[:, :Cout, :r_out].reshape(N, Cout, H1, Wp)
    out = out[:, :, ::stride, ::stride][:, :, :H_out, :W_out]
    return out.astype(x_nchw.dtype)


# ---------------------------------------------------------------------------
# Reference (pure JAX, f32) for sanity checking.
# ---------------------------------------------------------------------------
def conv2d_bn_activ_ref(x_nchw, weight, gamma, beta, running_mean, running_var,
                        *, stride=1, padding=0, eps=1e-5):
    y = jax.lax.conv_general_dilated(
        x_nchw.astype(jnp.float32), weight.astype(jnp.float32),
        window_strides=(stride, stride),
        padding=[(padding, padding), (padding, padding)],
        dimension_numbers=("NCHW", "OIHW", "NCHW"),
    )
    scale = (gamma / jnp.sqrt(running_var + eps)).reshape(1, -1, 1, 1)
    bias = (beta - running_mean * gamma / jnp.sqrt(running_var + eps)).reshape(1, -1, 1, 1)
    return jnp.maximum(y * scale + bias, 0.0)


if __name__ == "__main__":
    key = jax.random.PRNGKey(0)
    k_x, k_w, k_g, k_b, k_m, k_v = jax.random.split(key, 6)

    # Small shapes consistent with the module: Conv2dBNActiv(4, 8, 3, 1, 1)
    N, Cin, H, W = 2, 4, 16, 16
    Cout, ksize, stride, padding = 8, 3, 1, 1

    x = jax.random.normal(k_x, (N, Cin, H, W), dtype=jnp.float32)
    weight = jax.random.normal(k_w, (Cout, Cin, ksize, ksize), dtype=jnp.float32) * 0.1
    gamma = 1.0 + 0.1 * jax.random.normal(k_g, (Cout,), dtype=jnp.float32)
    beta = 0.1 * jax.random.normal(k_b, (Cout,), dtype=jnp.float32)
    running_mean = 0.1 * jax.random.normal(k_m, (Cout,), dtype=jnp.float32)
    running_var = jnp.abs(1.0 + 0.1 * jax.random.normal(k_v, (Cout,), dtype=jnp.float32))

    fn = functools.partial(conv2d_bn_activ, stride=stride, padding=padding)
    out = jax.jit(fn)(x, weight, gamma, beta, running_mean, running_var)
    out = jax.block_until_ready(out)

    ref = conv2d_bn_activ_ref(x, weight, gamma, beta, running_mean, running_var,
                              stride=stride, padding=padding)
    assert out.shape == (N, Cout, H, W)
    # bf16 operands + bf16 output (f32 accumulation) -> loose tolerance.
    assert jnp.allclose(out.astype(jnp.float32), ref, rtol=3e-2, atol=3e-2), \
        "mismatch vs reference"

    print("KERNEL_OK")
</pallas_src>

<mosaic_0001>
module attributes {stable_mosaic.version = 11 : i64} {
  func.func @_conv_bn_relu_kernel(%arg0: i32, %arg1: i32, %arg2: memref<1x16x512xbf16, #tpu.memory_space<vmem>>, %arg3: memref<8x144xbf16, #tpu.memory_space<vmem>>, %arg4: memref<8x1xf32, #tpu.memory_space<vmem>>, %arg5: memref<8x1xf32, #tpu.memory_space<vmem>>, %arg6: memref<1x8x384xbf16, #tpu.memory_space<vmem>>, %arg7: memref<144x384xbf16, #tpu.memory_space<vmem>>) attributes {dimension_semantics = [#tpu.dimension_semantics<parallel>, #tpu.dimension_semantics<parallel>], iteration_bounds = array<i64: 2, 1>, scalar_prefetch = 0 : i64, scratch_operands = 1 : i64, tpu.core_type = #tpu.core_type<tc>, window_params = [{transform_indices = @transform_0, window_bounds = array<i64: 1, 16, 512>}, {transform_indices = @transform_1, window_bounds = array<i64: 8, 144>}, {transform_indices = @transform_2, window_bounds = array<i64: 8, 1>}, {transform_indices = @transform_3, window_bounds = array<i64: 8, 1>}, {transform_indices = @transform_4, window_bounds = array<i64: 1, 8, 384>}]} {
    %c0 = arith.constant 0 : index
    %c0_0 = arith.constant 0 : index
    %c0_1 = arith.constant 0 : index
    %0 = vector.load %arg2[%c0, %c0_0, %c0_1] : memref<1x16x512xbf16, #tpu.memory_space<vmem>>, vector<1x16x384xbf16>
    %1 = vector.shape_cast %0 : vector<1x16x384xbf16> to vector<16x384xbf16>
    %c0_2 = arith.constant 0 : index
    %c0_3 = arith.constant 0 : index
    %2 = vector.load %arg7[%c0_2, %c0_3] : memref<144x384xbf16, #tpu.memory_space<vmem>>, vector<16x384xbf16>
    tpu.vector_store %arg7[%c0_2, %c0_3], %1 {strides = array<i32>} : memref<144x384xbf16, #tpu.memory_space<vmem>>, vector<16x384xbf16>,
    %c0_4 = arith.constant 0 : index
    %c0_5 = arith.constant 0 : index
    %c1 = arith.constant 1 : index
    %3 = vector.load %arg2[%c0_4, %c0_5, %c1] : memref<1x16x512xbf16, #tpu.memory_space<vmem>>, vector<1x16x384xbf16>
    %4 = vector.shape_cast %3 : vector<1x16x384xbf16> to vector<16x384xbf16>
    %c16 = arith.constant 16 : index
    %c0_6 = arith.constant 0 : index
    %5 = vector.load %arg7[%c16, %c0_6] : memref<144x384xbf16, #tpu.memory_space<vmem>>, vector<16x384xbf16>
    tpu.vector_store %arg7[%c16, %c0_6], %4 {strides = array<i32>} : memref<144x384xbf16, #tpu.memory_space<vmem>>, vector<16x384xbf16>,
    %c0_7 = arith.constant 0 : index
    %c0_8 = arith.constant 0 : index
    %c2 = arith.constant 2 : index
    %6 = vector.load %arg2[%c0_7, %c0_8, %c2] : memref<1x16x512xbf16, #tpu.memory_space<vmem>>, vector<1x16x384xbf16>
    %7 = vector.shape_cast %6 : vector<1x16x384xbf16> to vector<16x384xbf16>
    %c32 = arith.constant 32 : index
    %c0_9 = arith.constant 0 : index
    %8 = vector.load %arg7[%c32, %c0_9] : memref<144x384xbf16, #tpu.memory_space<vmem>>, vector<16x384xbf16>
    tpu.vector_store %arg7[%c32, %c0_9], %7 {strides = array<i32>} : memref<144x384xbf16, #tpu.memory_space<vmem>>, vector<16x384xbf16>,
    %c0_10 = arith.constant 0 : index
    %c0_11 = arith.constant 0 : index
    %c18 = arith.constant 18 : index
    %9 = vector.load %arg2[%c0_10, %c0_11, %c18] : memref<1x16x512xbf16, #tpu.memory_space<vmem>>, vector<1x16x384xbf16>
    %10 = vector.shape_cast %9 : vector<1x16x384xbf16> to vector<16x384xbf16>
    %c48 = arith.constant 48 : index
    %c0_12 = arith.constant 0 : index
    %11 = vector.load %arg7[%c48, %c0_12] : memref<144x384xbf16, #tpu.memory_space<vmem>>, vector<16x384xbf16>
    tpu.vector_store %arg7[%c48, %c0_12], %10 {strides = array<i32>} : memref<144x384xbf16, #tpu.memory_space<vmem>>, vector<16x384xbf16>,
    %c0_13 = arith.constant 0 : index
    %c0_14 = arith.constant 0 : index
    %c19 = arith.constant 19 : index
    %12 = vector.load %arg2[%c0_13, %c0_14, %c19] : memref<1x16x512xbf16, #tpu.memory_space<vmem>>, vector<1x16x384xbf16>
    %13 = vector.shape_cast %12 : vector<1x16x384xbf16> to vector<16x384xbf16>
    %c64 = arith.constant 64 : index
    %c0_15 = arith.constant 0 : index
    %14 = vector.load %arg7[%c64, %c0_15] : memref<144x384xbf16, #tpu.memory_space<vmem>>, vector<16x384xbf16>
    tpu.vector_store %arg7[%c64, %c0_15], %13 {strides = array<i32>} : memref<144x384xbf16, #tpu.memory_space<vmem>>, vector<16x384xbf16>,
    %c0_16 = arith.constant 0 : index
    %c0_17 = arith.constant 0 : index
    %c20 = arith.constant 20 : index
    %15 = vector.load %arg2[%c0_16, %c0_17, %c20] : memref<1x16x512xbf16, #tpu.memory_space<vmem>>, vector<1x16x384xbf16>
    %16 = vector.shape_cast %15 : vector<1x16x384xbf16> to vector<16x384xbf16>
    %c80 = arith.constant 80 : index
    %c0_18 = arith.constant 0 : index
    %17 = vector.load %arg7[%c80, %c0_18] : memref<144x384xbf16, #tpu.memory_space<vmem>>, vector<16x384xbf16>
    tpu.vector_store %arg7[%c80, %c0_18], %16 {strides = array<i32>} : memref<144x384xbf16, #tpu.memory_space<vmem>>, vector<16x384xbf16>,
    %c0_19 = arith.constant 0 : index
    %c0_20 = arith.constant 0 : index
    %c36 = arith.constant 36 : index
    %18 = vector.load %arg2[%c0_19, %c0_20, %c36] : memref<1x16x512xbf16, #tpu.memory_space<vmem>>, vector<1x16x384xbf16>
    %19 = vector.shape_cast %18 : vector<1x16x384xbf16> to vector<16x384xbf16>
    %c96 = arith.constant 96 : index
    %c0_21 = arith.constant 0 : index
    %20 = vector.load %arg7[%c96, %c0_21] : memref<144x384xbf16, #tpu.memory_space<vmem>>, vector<16x384xbf16>
    tpu.vector_store %arg7[%c96, %c0_21], %19 {strides = array<i32>} : memref<144x384xbf16, #tpu.memory_space<vmem>>, vector<16x384xbf16>,
    %c0_22 = arith.constant 0 : index
    %c0_23 = arith.constant 0 : index
    %c37 = arith.constant 37 : index
    %21 = vector.load %arg2[%c0_22, %c0_23, %c37] : memref<1x16x512xbf16, #tpu.memory_space<vmem>>, vector<1x16x384xbf16>
    %22 = vector.shape_cast %21 : vector<1x16x384xbf16> to vector<16x384xbf16>
    %c112 = arith.constant 112 : index
    %c0_24 = arith.constant 0 : index
    %23 = vector.load %arg7[%c112, %c0_24] : memref<144x384xbf16, #tpu.memory_space<vmem>>, vector<16x384xbf16>
    tpu.vector_store %arg7[%c112, %c0_24], %22 {strides = array<i32>} : memref<144x384xbf16, #tpu.memory_space<vmem>>, vector<16x384xbf16>,
    %c0_25 = arith.constant 0 : index
    %c0_26 = arith.constant 0 : index
    %c38 = arith.constant 38 : index
    %24 = vector.load %arg2[%c0_25, %c0_26, %c38] : memref<1x16x512xbf16, #tpu.memory_space<vmem>>, vector<1x16x384xbf16>
    %25 = vector.shape_cast %24 : vector<1x16x384xbf16> to vector<16x384xbf16>
    %c128 = arith.constant 128 : index
    %c0_27 = arith.constant 0 : index
    %26 = vector.load %arg7[%c128, %c0_27] : memref<144x384xbf16, #tpu.memory_space<vmem>>, vector<16x384xbf16>
    tpu.vector_store %arg7[%c128, %c0_27], %25 {strides = array<i32>} : memref<144x384xbf16, #tpu.memory_space<vmem>>, vector<16x384xbf16>,
    %c0_28 = arith.constant 0 : index
    %c0_29 = arith.constant 0 : index
    %27 = vector.load %arg3[%c0_28, %c0_29] : memref<8x144xbf16, #tpu.memory_space<vmem>>, vector<8x144xbf16>
    %c0_30 = arith.constant 0 : index
    %c0_31 = arith.constant 0 : index
    %28 = vector.load %arg7[%c0_30, %c0_31] : memref<144x384xbf16, #tpu.memory_space<vmem>>, vector<144x384xbf16>
    %cst = arith.constant dense<0.000000e+00> : vector<8x384xf32>
    %29 = tpu.matmul %27, %28, %cst {dimension_numbers = #tpu.dot_dimension_numbers<[1], [0], [0], [1], [0, 0, 1, 1], [], []>} : vector<8x144xbf16>, vector<144x384xbf16>, vector<8x384xf32> -> vector<8x384xf32>
    %c0_32 = arith.constant 0 : index
    %c0_33 = arith.constant 0 : index
    %30 = vector.load %arg4[%c0_32, %c0_33] : memref<8x1xf32, #tpu.memory_space<vmem>>, vector<8x1xf32>
    %31 = vector.broadcast %30 : vector<8x1xf32> to vector<8x384xf32>
    %32 = arith.mulf %29, %31 : vector<8x384xf32>
    %c0_34 = arith.constant 0 : index
    %c0_35 = arith.constant 0 : index
    %33 = vector.load %arg5[%c0_34, %c0_35] : memref<8x1xf32, #tpu.memory_space<vmem>>, vector<8x1xf32>
    %34 = vector.broadcast %33 : vector<8x1xf32> to vector<8x384xf32>
    %35 = arith.addf %32, %34 : vector<8x384xf32>
    %cst_36 = arith.constant 0.000000e+00 : f32
    %36 = vector.broadcast %cst_36 : f32 to vector<8x384xf32>
    %37 = arith.maximumf %35, %36 : vector<8x384xf32>
    %38 = arith.truncf %37 : vector<8x384xf32> to vector<8x384xbf16>
    %c0_37 = arith.constant 0 : index
    %c0_38 = arith.constant 0 : index
    %c0_39 = arith.constant 0 : index
    %39 = vector.load %arg6[%c0_37, %c0_38, %c0_39] : memref<1x8x384xbf16, #tpu.memory_space<vmem>>, vector<1x8x384xbf16>
    %40 = vector.shape_cast %39 : vector<1x8x384xbf16> to vector<8x384xbf16>
    %41 = vector.shape_cast %38 : vector<8x384xbf16> to vector<1x8x384xbf16>
    tpu.vector_store %arg6[%c0_37, %c0_38, %c0_39], %41 {strides = array<i32>} : memref<1x8x384xbf16, #tpu.memory_space<vmem>>, vector<1x8x384xbf16>,
    return
  }
  func.func @transform_0(%arg0: i32, %arg1: i32) -> (i32, i32, i32) {
    %c0_i32 = arith.constant 0 : i32
    %c0_i32_0 = arith.constant 0 : i32
    %c0_i32_1 = arith.constant 0 : i32
    return %arg0, %c0_i32, %c0_i32_0 : i32, i32, i32
  }
  func.func @transform_1(%arg0: i32, %arg1: i32) -> (i32, i32) {
    %c0_i32 = arith.constant 0 : i32
    %c0_i32_0 = arith.constant 0 : i32
    return %arg1, %c0_i32 : i32, i32
  }
  func.func @transform_2(%arg0: i32, %arg1: i32) -> (i32, i32) {
    %c0_i32 = arith.constant 0 : i32
    %c0_i32_0 = arith.constant 0 : i32
    return %arg1, %c0_i32 : i32, i32
  }
  func.func @transform_3(%arg0: i32, %arg1: i32) -> (i32, i32) {
    %c0_i32 = arith.constant 0 : i32
    %c0_i32_0 = arith.constant 0 : i32
    return %arg1, %c0_i32 : i32, i32
  }
  func.func @transform_4(%arg0: i32, %arg1: i32) -> (i32, i32, i32) {
    %c0_i32 = arith.constant 0 : i32
    %c0_i32_0 = arith.constant 0 : i32
    return %arg0, %arg1, %c0_i32 : i32, i32, i32
  }
}

</mosaic_0001>

<llo_original>
// kernel: conv2d_bn_activ.1
$region0: #{conv2d_bn_activ.1}
  #allocation0 [shape = 'u32[]', space=smem, size = 0x4, offset = 0x4, fixed_abs, tag = 'smem constant byte address 0x4 - core index']
  #allocation1 [shape = 'u32[72,128]{1,0:T(1,128)}', space=vmem, size = 0x9000, scoped, tag = 'internal scratch']
  #allocation2 [shape = 'bf16[144,384]{1,0:T(8,128)(2,1)}', space=vmem, size = 0x1b000, scoped, tag = 'scratch operand']
  %s0 = inlined_call_operand.vmem [shape: bf16[2,16,512], index: 0, kind: input, shape index: {}]
  %s1 = inlined_call_operand.vmem [shape: bf16[8,144], index: 1, kind: input, shape index: {}]
  %s2 = inlined_call_operand.vmem [shape: f32[8,1], index: 2, kind: input, shape index: {}]
  %s3 = inlined_call_operand.vmem [shape: f32[8,1], index: 3, kind: input, shape index: {}]
  %s4 = inlined_call_operand.vmem [shape: bf16[2,8,384], index: 4, kind: output, shape index: {}]
  %s5 = sld [smem:[#allocation0]]
  $region49: #{conv2d_bn_activ.1} parent=0
    _
  %s7 = ssub.s32 1, %s5
  %s8 = scalar_select 0, %s7, %s5
  loop: start=0, step=1, limit=4
  $region2: #{conv2d_bn_activ.1} parent=0 // loop_pre_header
    _
  $region3: #{conv2d_bn_activ.1} parent=0 // loop_header
    %s10 = sphi 0, %s14
    %p11 = scmp.ge.s32.totalorder %s10, 4
    %s17 = sphi 0, %s29
    %s18 = sphi 0, %s25
    %s19 = sphi 0, %s17
    %s20 = sphi 0, %s18
    %s21 = sphi 0, %s19
    %s22 = sphi 0, %s20
    %s32 = sphi 0, %s34
    %s35 = sphi 0, %s32
    %s36 = sphi 0, %s35
    %s52 = sphi 0, %s36
    %s58 = sphi 0, %s60
    %s61 = sphi 0, %s58
    %s62 = sphi 0, %s61
    %s78 = sphi 0, %s62
    %s84 = sphi 0, %s86
    %s87 = sphi 0, %s84
    %s88 = sphi 0, %s87
    %s104 = sphi 0, %s88
    %s110 = sphi 0, %s112
    %s113 = sphi 0, %s110
    %s114 = sphi 0, %s113
    %s130 = sphi 0, %s114
    %s138 = sphi 0, %s140
    %s141 = sphi 0, %s138
    %s142 = sphi 0, %s141
    %s158 = sphi 0, %s142
  $region4: #{conv2d_bn_activ.1} parent=0 // loop_header_branch
    %13 = sbr.rel (%p11) target = $region8
  $region5: #{conv2d_bn_activ.1} parent=0 // loop_body
    %s15 = ssub.s32 %s10, 1
    %s16 = ssub.s32 %s10, 2
    %s23 = sadd.s32 1, %s18
    %p24 = scmp.ge.s32.totalorder %s23, 1
    %s25 = scalar_select %p24, 0, %s23
    %s26 = sadd.s32 1, %s17
    %s27 = scalar_select %p24, %s26, %s17
    %p28 = scmp.ge.s32.totalorder %s27, 2
    %s29 = scalar_select %p28, 0, %s27
    %s30 = ssub.s32 %s17, %s29
    %p31 = scmp.eq.s32.totalorder %s30, 0
    %s33 = sadd.s32 %s32, 1
    %s34 = scalar_select %p31, %s32, %s33
    %p37 = pneg %p31
    %p38 = scmp.eq.s32.totalorder %s10, 1
    %p39 = por %p37, %p38
    %p40 = scmp.ne.s32.totalorder %s32, %s35
    %p41 = scmp.eq.s32.totalorder %s10, 0
    %p42 = por %p40, %p41
    %p43 = scmp.ne.s32.totalorder %s32, %s35
    %p44 = scmp.eq.s32.totalorder %s15, 1
    %p45 = por %p43, %p44
    %p46 = scmp.ne.s32.totalorder %s35, %s36
    %p47 = scmp.eq.s32.totalorder %s15, 0
    %p48 = por %p46, %p47
    %p49 = scmp.ne.s32.totalorder %s35, %s36
    %p50 = scmp.eq.s32.totalorder %s16, 1
    %p51 = por %p49, %p50
    %p53 = scmp.ne.s32.totalorder %s36, %s52
    %p54 = scmp.eq.s32.totalorder %s16, 0
    %p55 = por %p53, %p54
    %s56 = ssub.s32 %s18, %s25
    %p57 = scmp.eq.s32.totalorder %s56, 0
    %s59 = sadd.s32 %s58, 1
    %s60 = scalar_select %p57, %s58, %s59
    %p63 = pneg %p57
    %p64 = scmp.eq.s32.totalorder %s10, 1
    %p65 = por %p63, %p64
    %p66 = scmp.ne.s32.totalorder %s58, %s61
    %p67 = scmp.eq.s32.totalorder %s10, 0
    %p68 = por %p66, %p67
    %p69 = scmp.ne.s32.totalorder %s58, %s61
    %p70 = scmp.eq.s32.totalorder %s15, 1
    %p71 = por %p69, %p70
    %p72 = scmp.ne.s32.totalorder %s61, %s62
    %p73 = scmp.eq.s32.totalorder %s15, 0
    %p74 = por %p72, %p73
    %p75 = scmp.ne.s32.totalorder %s61, %s62
    %p76 = scmp.eq.s32.totalorder %s16, 1
    %p77 = por %p75, %p76
    %p79 = scmp.ne.s32.totalorder %s62, %s78
    %p80 = scmp.eq.s32.totalorder %s16, 0
    %p81 = por %p79, %p80
    %s82 = ssub.s32 %s18, %s25
    %p83 = scmp.eq.s32.totalorder %s82, 0
    %s85 = sadd.s32 %s84, 1
    %s86 = scalar_select %p83, %s84, %s85
    %p89 = pneg %p83
    %p90 = scmp.eq.s32.totalorder %s10, 1
    %p91 = por %p89, %p90
    %p92 = scmp.ne.s32.totalorder %s84, %s87
    %p93 = scmp.eq.s32.totalorder %s10, 0
    %p94 = por %p92, %p93
    %p95 = scmp.ne.s32.totalorder %s84, %s87
    %p96 = scmp.eq.s32.totalorder %s15, 1
    %p97 = por %p95, %p96
    %p98 = scmp.ne.s32.totalorder %s87, %s88
    %p99 = scmp.eq.s32.totalorder %s15, 0
    %p100 = por %p98, %p99
    %p101 = scmp.ne.s32.totalorder %s87, %s88
    %p102 = scmp.eq.s32.totalorder %s16, 1
    %p103 = por %p101, %p102
    %p105 = scmp.ne.s32.totalorder %s88, %s104
    %p106 = scmp.eq.s32.totalorder %s16, 0
    %p107 = por %p105, %p106
    %s108 = ssub.s32 %s18, %s25
    %p109 = scmp.eq.s32.totalorder %s108, 0
    %s111 = sadd.s32 %s110, 1
    %s112 = scalar_select %p109, %s110, %s111
    %p115 = pneg %p109
    %p116 = scmp.eq.s32.totalorder %s10, 1
    %p117 = por %p115, %p116
    %p118 = scmp.ne.s32.totalorder %s110, %s113
    %p119 = scmp.eq.s32.totalorder %s10, 0
    %p120 = por %p118, %p119
    %p121 = scmp.ne.s32.totalorder %s110, %s113
    %p122 = scmp.eq.s32.totalorder %s15, 1
    %p123 = por %p121, %p122
    %p124 = scmp.ne.s32.totalorder %s113, %s114
    %p125 = scmp.eq.s32.totalorder %s15, 0
    %p126 = por %p124, %p125
    %p127 = scmp.ne.s32.totalorder %s113, %s114
    %p128 = scmp.eq.s32.totalorder %s16, 1
    %p129 = por %p127, %p128
    %p131 = scmp.ne.s32.totalorder %s114, %s130
    %p132 = scmp.eq.s32.totalorder %s16, 0
    %p133 = por %p131, %p132
    %s134 = ssub.s32 %s17, %s29
    %s135 = ssub.s32 %s18, %s25
    %s136 = sor.u32 %s134, %s135
    %p137 = scmp.eq.s32.totalorder %s136, 0
    %s139 = sadd.s32 %s138, 1
    %s140 = scalar_select %p137, %s138, %s139
    %p143 = pneg %p137
    %p144 = scmp.eq.s32.totalorder %s10, 1
    %p145 = por %p143, %p144
    %p146 = scmp.ne.s32.totalorder %s138, %s141
    %p147 = scmp.eq.s32.totalorder %s10, 0
    %p148 = por %p146, %p147
    %p149 = scmp.ne.s32.totalorder %s138, %s141
    %p150 = scmp.eq.s32.totalorder %s15, 1
    %p151 = por %p149, %p150
    %p152 = scmp.ne.s32.totalorder %s141, %s142
    %p153 = scmp.eq.s32.totalorder %s15, 0
    %p154 = por %p152, %p153
    %p155 = scmp.ne.s32.totalorder %s141, %s142
    %p156 = scmp.eq.s32.totalorder %s16, 1
    %p157 = por %p155, %p156
    %p159 = scmp.ne.s32.totalorder %s142, %s158
    %p160 = scmp.eq.s32.totalorder %s16, 0
    %p161 = por %p159, %p160
    %p162 = scmp.le.s32.totalorder 1, %s10
    %p163 = scmp.lt.s32.totalorder %s10, 3
    %p164 = pnand %p162, %p163
    %p165 = pneg %p164
    // Predicated region
    $region9: #{conv2d_bn_activ.1} parent=5 // pred_check
      _
    $region10: #{conv2d_bn_activ.1} parent=5 // pred_check_branch
      %167 = sbr.rel (%p164) target = $region12
    $region11: #{conv2d_bn_activ.1} parent=5 // pred_region
      %s168 = ssub.s32 %s10, 1
      // Predicated region
      $region13: #{conv2d_bn_activ.1} parent=11 // pred_check
        %p169 = pneg %p74
      $region14: #{conv2d_bn_activ.1} parent=11 // pred_check_branch
        %171 = sbr.rel (%p169) target = $region16
      $region15: #{conv2d_bn_activ.1} parent=11 // pred_region
        %p172 = scmp.lt.s32.totalorder %s20, 0
        %s173 = scalar_select %p172, %s20, 0
        %s174 = smul.addr %s173, 2
        %s175 = smul.addr %s174, 4
        %s176 = scalar_lea.vmem %s1, %s175
      $region16: #{conv2d_bn_activ.1} parent=11 // pred_fallthru
        _
      // Predicated region
      $region17: #{conv2d_bn_activ.1} parent=11 // pred_check
        %p177 = pneg %p100
      $region18: #{conv2d_bn_activ.1} parent=11 // pred_check_branch
        %179 = sbr.rel (%p177) target = $region20
      $region19: #{conv2d_bn_activ.1} parent=11 // pred_region
        %p180 = scmp.lt.s32.totalorder %s20, 0
        %s181 = scalar_select %p180, %s20, 0
        %s182 = smul.addr %s181, 8
        %s183 = scalar_lea.vmem %s2, %s182
      $region20: #{conv2d_bn_activ.1} parent=11 // pred_fallthru
        _
      // Predicated region
      $region21: #{conv2d_bn_activ.1} parent=11 // pred_check
        %p184 = pneg %p126
      $region22: #{conv2d_bn_activ.1} parent=11 // pred_check_branch
        %186 = sbr.rel (%p184) target = $region24
      $region23: #{conv2d_bn_activ.1} parent=11 // pred_region
        %p187 = scmp.lt.s32.totalorder %s20, 0
        %s188 = scalar_select %p187, %s20, 0
        %s189 = smul.addr %s188, 8
        %s190 = scalar_lea.vmem %s3, %s189
      $region24: #{conv2d_bn_activ.1} parent=11 // pred_fallthru
        _
    $region12: #{conv2d_bn_activ.1} parent=5 // pred_fallthru
      _
    %p191 = scmp.lt.s32.totalorder %s10, 2
    // Predicated region
    $region25: #{conv2d_bn_activ.1} parent=5 // pred_check
      %p192 = pneg %p191
    $region26: #{conv2d_bn_activ.1} parent=5 // pred_check_branch
      %194 = sbr.rel (%p192) target = $region28
    $region27: #{conv2d_bn_activ.1} parent=5 // pred_region
      // Predicated region
      $region29: #{conv2d_bn_activ.1} parent=27 // pred_check
        %p195 = pneg %p42
      $region30: #{conv2d_bn_activ.1} parent=27 // pred_check_branch
        %197 = sbr.rel (%p195) target = $region32
      $region31: #{conv2d_bn_activ.1} parent=27 // pred_region
        %p198 = scmp.lt.s32.totalorder %s17, 1
        %s199 = scalar_select %p198, %s17, 1
        %s200 = smul.addr %s199, 8
        %s201 = smul.addr %s200, 4
        %s202 = scalar_lea.vmem %s0, %s201
      $region32: #{conv2d_bn_activ.1} parent=27 // pred_fallthru
        _
    $region28: #{conv2d_bn_activ.1} parent=5 // pred_fallthru
      _
    %p203 = scmp.le.s32.totalorder 1, %s10
    %p204 = scmp.lt.s32.totalorder %s10, 3
    %p205 = pnand %p203, %p204
    %p206 = pneg %p205
    // Predicated region
    $region33: #{conv2d_bn_activ.1} parent=5 // pred_check
      _
    $region34: #{conv2d_bn_activ.1} parent=5 // pred_check_branch
      %208 = sbr.rel (%p205) target = $region36
    $region35: #{conv2d_bn_activ.1} parent=5 // pred_region
      %s209 = ssub.s32 %s10, 1
      %p210 = scmp.lt.s32.totalorder %s19, 1
      %s211 = scalar_select %p210, %s19, 1
      %s212 = smul.addr %s211, 8
      %s213 = smul.addr %s212, 4
      %s214 = scalar_lea.vmem %s0, %s213
      %p215 = pneg %p48
      %p216 = pneg %p45
      %p217 = scmp.lt.s32.totalorder %s20, 0
      %s218 = scalar_select %p217, %s20, 0
      %s219 = smul.addr %s218, 2
      %s220 = smul.addr %s219, 4
      %s221 = scalar_lea.vmem %s1, %s220
      %p222 = pneg %p74
      %p223 = pneg %p71
      %p224 = scmp.lt.s32.totalorder %s20, 0
      %s225 = scalar_select %p224, %s20, 0
      %s226 = smul.addr %s225, 8
      %s227 = scalar_lea.vmem %s2, %s226
      %p228 = pneg %p100
      %p229 = pneg %p97
      %p230 = scmp.lt.s32.totalorder %s20, 0
      %s231 = scalar_select %p230, %s20, 0
      %s232 = smul.addr %s231, 8
      %s233 = scalar_lea.vmem %s3, %s232
      %p234 = pneg %p126
      %p235 = pneg %p123
      %p236 = pneg %p154
      %p237 = pneg %p151
      %p238 = scmp.lt.s32.totalorder %s19, 1
      %s239 = scalar_select %p238, %s19, 1
      %p240 = scmp.lt.s32.totalorder %s20, 0
      %s241 = scalar_select %p240, %s20, 0
      %s242 = smul.addr %s241, 3
      %s243 = smul.addr %s239, 3
      %s244 = sadd.s32 %s242, %s243
      %s245 = smul.addr %s244, 4
      %s246 = scalar_lea.vmem %s4, %s245
      %p247 = scmp.lt.s32.totalorder %s19, 1
      %s248 = scalar_select %p247, %s19, 1
      %s249 = smul.addr %s248, 8
      %s250 = smul.addr %s249, 4
      %s251 = scalar_lea.vmem %s0, %s250
      %p252 = scmp.lt.s32.totalorder %s20, 0
      %s253 = scalar_select %p252, %s20, 0
      %s254 = smul.addr %s253, 2
      %s255 = smul.addr %s254, 4
      %s256 = scalar_lea.vmem %s1, %s255
      %p257 = scmp.lt.s32.totalorder %s20, 0
      %s258 = scalar_select %p257, %s20, 0
      %s259 = smul.addr %s258, 8
      %s260 = scalar_lea.vmem %s2, %s259
      %p261 = scmp.lt.s32.totalorder %s20, 0
      %s262 = scalar_select %p261, %s20, 0
      %s263 = smul.addr %s262, 8
      %s264 = scalar_lea.vmem %s3, %s263
      %p265 = scmp.lt.s32.totalorder %s19, 1
      %s266 = scalar_select %p265, %s19, 1
      %p267 = scmp.lt.s32.totalorder %s20, 0
      %s268 = scalar_select %p267, %s20, 0
      %s269 = smul.addr %s268, 3
      %s270 = smul.addr %s266, 3
      %s271 = sadd.s32 %s269, %s270
      %s272 = smul.addr %s271, 4
      %s273 = scalar_lea.vmem %s4, %s272
      %v275 = vld [vmem:[%s251] sm:$0xff]
      %v276 = vld [vmem:[%s251 + $0x8] sm:$0xf]
      %v277 = vld [vmem:[%s251 + $0x10] sm:$0xff]
      %v278 = vld [vmem:[%s251 + $0x18] sm:$0xf]
      %279 = vst [vmem:[#allocation2] sm:$0xff] %v275
      %280 = vst [vmem:[#allocation2 + $0x8] sm:$0xf] %v276
      %281 = vst [vmem:[#allocation2 + $0xc] sm:$0xff] %v277
      %282 = vst [vmem:[#allocation2 + $0x14] sm:$0xf] %v278
      %v283 = vld [vmem:[%s251] sm:$0xff]
      %v284 = vld [vmem:[%s251 + $0x8] sm:$0xff]
      %v285 = vld [vmem:[%s251 + $0x10] sm:$0xff]
      %v286 = vld [vmem:[%s251 + $0x18] sm:$0xff]
      %291 = vrot.lane.b32.xlu0 %v283, 127
      %v292 = vpop.permute.xlu0 %291
      %293 = vrot.lane.b32.xlu0 %v284, 127
      %v294 = vpop.permute.xlu0 %293
      %295 = vrot.lane.b32.xlu0 %v285, 127
      %v296 = vpop.permute.xlu0 %295
      %297 = vrot.lane.b32.xlu0 %v286, 127
      %v298 = vpop.permute.xlu0 %297
      %v299 = vrot.slane %v292, 4
      %v300 = vrot.slane %v294, 4
      %v301 = vrot.slane %v296, 4
      %v302 = vrot.slane %v298, 4
      %vm303 = vcmask 1043456
      %v304 = vsel %vm303, %v299, %v300
      %vm305 = vcmask 1039360
      %v306 = vsel %vm305, %v292, %v304
      %v307 = vsel %vm305, %v294, %v300
      %v308 = vsel %vm303, %v301, %v302
      %v309 = vsel %vm305, %v296, %v308
      %v310 = vsel %vm305, %v298, %v302
      %315 = vst [vmem:[#allocation2 + $0x18] sm:$0xff] %v306
      %316 = vst [vmem:[#allocation2 + $0x20] sm:$0xf] %v307
      %317 = vst [vmem:[#allocation2 + $0x24] sm:$0xff] %v309
      %318 = vst [vmem:[#allocation2 + $0x2c] sm:$0xf] %v310
      %v319 = vld [vmem:[%s251] sm:$0xff]
      %v320 = vld [vmem:[%s251 + $0x8] sm:$0xff]
      %v321 = vld [vmem:[%s251 + $0x10] sm:$0xff]
      %v322 = vld [vmem:[%s251 + $0x18] sm:$0xff]
      %327 = vrot.lane.b32.xlu0 %v319, 126
      %v328 = vpop.permute.xlu0 %327
      %329 = vrot.lane.b32.xlu0 %v320, 126
      %v330 = vpop.permute.xlu0 %329
      %331 = vrot.lane.b32.xlu0 %v321, 126
      %v332 = vpop.permute.xlu0 %331
      %333 = vrot.lane.b32.xlu0 %v322, 126
      %v334 = vpop.permute.xlu0 %333
      %v335 = vrot.slane %v328, 4
      %v336 = vrot.slane %v330, 4
      %v337 = vrot.slane %v332, 4
      %v338 = vrot.slane %v334, 4
      %v339 = vsel %vm303, %v335, %v336
      %vm340 = vcmask 1031168
      %v341 = vsel %vm340, %v328, %v339
      %v342 = vsel %vm340, %v330, %v336
      %v343 = vsel %vm303, %v337, %v338
      %v344 = vsel %vm340, %v332, %v343
      %v345 = vsel %vm340, %v334, %v338
      %350 = vst [vmem:[#allocation2 + $0x30] sm:$0xff] %v341
      %351 = vst [vmem:[#allocation2 + $0x38] sm:$0xf] %v342
      %352 = vst [vmem:[#allocation2 + $0x3c] sm:$0xff] %v344
      %353 = vst [vmem:[#allocation2 + $0x44] sm:$0xf] %v345
      %v354 = vld [vmem:[%s251] sm:$0xff]
      %v355 = vld [vmem:[%s251 + $0x8] sm:$0xff]
      %v356 = vld [vmem:[%s251 + $0x10] sm:$0xff]
      %v357 = vld [vmem:[%s251 + $0x18] sm:$0xff]
      %362 = vrot.lane.b32.xlu0 %v354, 110
      %v363 = vpop.permute.xlu0 %362
      %364 = vrot.lane.b32.xlu0 %v355, 110
      %v365 = vpop.permute.xlu0 %364
      %366 = vrot.lane.b32.xlu0 %v356, 110
      %v367 = vpop.permute.xlu0 %366
      %368 = vrot.lane.b32.xlu0 %v357, 110
      %v369 = vpop.permute.xlu0 %368
      %v370 = vrot.slane %v363, 4
      %v371 = vrot.slane %v365, 4
      %v372 = vrot.slane %v367, 4
      %v373 = vrot.slane %v369, 4
      %v374 = vsel %vm303, %v370, %v371
      %vm375 = vcmask 900096
      %v376 = vsel %vm375, %v363, %v374
      %v377 = vsel %vm375, %v365, %v371
      %v378 = vsel %vm303, %v372, %v373
      %v379 = vsel %vm375, %v367, %v378
      %v380 = vsel %vm375, %v369, %v373
      %385 = vst [vmem:[#allocation2 + $0x48] sm:$0xff] %v376
      %386 = vst [vmem:[#allocation2 + $0x50] sm:$0xf] %v377
      %387 = vst [vmem:[#allocation2 + $0x54] sm:$0xff] %v379
      %388 = vst [vmem:[#allocation2 + $0x5c] sm:$0xf] %v380
      %v389 = vld [vmem:[%s251] sm:$0xff]
      %v390 = vld [vmem:[%s251 + $0x8] sm:$0xff]
      %v391 = vld [vmem:[%s251 + $0x10] sm:$0xff]
      %v392 = vld [vmem:[%s251 + $0x18] sm:$0xff]
      %397 = vrot.lane.b32.xlu0 %v389, 109
      %v398 = vpop.permute.xlu0 %397
      %399 = vrot.lane.b32.xlu0 %v390, 109
      %v400 = vpop.permute.xlu0 %399
      %401 = vrot.lane.b32.xlu0 %v391, 109
      %v402 = vpop.permute.xlu0 %401
      %403 = vrot.lane.b32.xlu0 %v392, 109
      %v404 = vpop.permute.xlu0 %403
      %v405 = vrot.slane %v398, 4
      %v406 = vrot.slane %v400, 4
      %v407 = vrot.slane %v402, 4
      %v408 = vrot.slane %v404, 4
      %v409 = vsel %vm303, %v405, %v406
      %vm410 = vcmask 891904
      %v411 = vsel %vm410, %v398, %v409
      %v412 = vsel %vm410, %v400, %v406
      %v413 = vsel %vm303, %v407, %v408
      %v414 = vsel %vm410, %v402, %v413
      %v415 = vsel %vm410, %v404, %v408
      %420 = vst [vmem:[#allocation2 + $0x60] sm:$0xff] %v411
      %421 = vst [vmem:[#allocation2 + $0x68] sm:$0xf] %v412
      %422 = vst [vmem:[#allocation2 + $0x6c] sm:$0xff] %v414
      %423 = vst [vmem:[#allocation2 + $0x74] sm:$0xf] %v415
      %v424 = vld [vmem:[%s251] sm:$0xff]
      %v425 = vld [vmem:[%s251 + $0x8] sm:$0xff]
      %v426 = vld [vmem:[%s251 + $0x10] sm:$0xff]
      %v427 = vld [vmem:[%s251 + $0x18] sm:$0xff]
      %432 = vrot.lane.b32.xlu0 %v424, 108
      %v433 = vpop.permute.xlu0 %432
      %434 = vrot.lane.b32.xlu0 %v425, 108
      %v435 = vpop.permute.xlu0 %434
      %436 = vrot.lane.b32.xlu0 %v426, 108
      %v437 = vpop.permute.xlu0 %436
      %438 = vrot.lane.b32.xlu0 %v427, 108
      %v439 = vpop.permute.xlu0 %438
      %v440 = vrot.slane %v433, 4
      %v441 = vrot.slane %v435, 4
      %v442 = vrot.slane %v437, 4
      %v443 = vrot.slane %v439, 4
      %v444 = vsel %vm303, %v440, %v441
      %vm445 = vcmask 883712
      %v446 = vsel %vm445, %v433, %v444
      %v447 = vsel %vm445, %v435, %v441
      %v448 = vsel %vm303, %v442, %v443
      %v449 = vsel %vm445, %v437, %v448
      %v450 = vsel %vm445, %v439, %v443
      %455 = vst [vmem:[#allocation2 + $0x78] sm:$0xff] %v446
      %456 = vst [vmem:[#allocation2 + $0x80] sm:$0xf] %v447
      %457 = vst [vmem:[#allocation2 + $0x84] sm:$0xff] %v449
      %458 = vst [vmem:[#allocation2 + $0x8c] sm:$0xf] %v450
      %v459 = vld [vmem:[%s251] sm:$0xff]
      %v460 = vld [vmem:[%s251 + $0x8] sm:$0xff]
      %v461 = vld [vmem:[%s251 + $0x10] sm:$0xff]
      %v462 = vld [vmem:[%s251 + $0x18] sm:$0xff]
      %467 = vrot.lane.b32.xlu0 %v459, 92
      %v468 = vpop.permute.xlu0 %467
      %469 = vrot.lane.b32.xlu0 %v460, 92
      %v470 = vpop.permute.xlu0 %469
      %471 = vrot.lane.b32.xlu0 %v461, 92
      %v472 = vpop.permute.xlu0 %471
      %473 = vrot.lane.b32.xlu0 %v462, 92
      %v474 = vpop.permute.xlu0 %473
      %v475 = vrot.slane %v468, 4
      %v476 = vrot.slane %v470, 4
      %v477 = vrot.slane %v472, 4
      %v478 = vrot.slane %v474, 4
      %v479 = vsel %vm303, %v475, %v476
      %vm480 = vcmask 752640
      %v481 = vsel %vm480, %v468, %v479
      %v482 = vsel %vm480, %v470, %v476
      %v483 = vsel %vm303, %v477, %v478
      %v484 = vsel %vm480, %v472, %v483
      %v485 = vsel %vm480, %v474, %v478
      %490 = vst [vmem:[#allocation2 + $0x90] sm:$0xff] %v481
      %491 = vst [vmem:[#allocation2 + $0x98] sm:$0xf] %v482
      %492 = vst [vmem:[#allocation2 + $0x9c] sm:$0xff] %v484
      %493 = vst [vmem:[#allocation2 + $0xa4] sm:$0xf] %v485
      %v494 = vld [vmem:[%s251] sm:$0xff]
      %v495 = vld [vmem:[%s251 + $0x8] sm:$0xff]
      %v496 = vld [vmem:[%s251 + $0x10] sm:$0xff]
      %v497 = vld [vmem:[%s251 + $0x18] sm:$0xff]
      %502 = vrot.lane.b32.xlu0 %v494, 91
      %v503 = vpop.permute.xlu0 %502
      %504 = vrot.lane.b32.xlu0 %v495, 91
      %v505 = vpop.permute.xlu0 %504
      %506 = vrot.lane.b32.xlu0 %v496, 91
      %v507 = vpop.permute.xlu0 %506
      %508 = vrot.lane.b32.xlu0 %v497, 91
      %v509 = vpop.permute.xlu0 %508
      %v510 = vrot.slane %v503, 4
      %v511 = vrot.slane %v505, 4
      %v512 = vrot.slane %v507, 4
      %v513 = vrot.slane %v509, 4
      %v514 = vsel %vm303, %v510, %v511
      %vm515 = vcmask 744448
      %v516 = vsel %vm515, %v503, %v514
      %v517 = vsel %vm515, %v505, %v511
      %v518 = vsel %vm303, %v512, %v513
      %v519 = vsel %vm515, %v507, %v518
      %v520 = vsel %vm515, %v509, %v513
      %525 = vst [vmem:[#allocation2 + $0xa8] sm:$0xff] %v516
      %526 = vst [vmem:[#allocation2 + $0xb0] sm:$0xf] %v517
      %527 = vst [vmem:[#allocation2 + $0xb4] sm:$0xff] %v519
      %528 = vst [vmem:[#allocation2 + $0xbc] sm:$0xf] %v520
      %v529 = vld [vmem:[%s251] sm:$0xff]
      %v530 = vld [vmem:[%s251 + $0x8] sm:$0xff]
      %v531 = vld [vmem:[%s251 + $0x10] sm:$0xff]
      %v532 = vld [vmem:[%s251 + $0x18] sm:$0xff]
      %537 = vrot.lane.b32.xlu0 %v529, 90
      %v538 = vpop.permute.xlu0 %537
      %539 = vrot.lane.b32.xlu0 %v530, 90
      %v540 = vpop.permute.xlu0 %539
      %541 = vrot.lane.b32.xlu0 %v531, 90
      %v542 = vpop.permute.xlu0 %541
      %543 = vrot.lane.b32.xlu0 %v532, 90
      %v544 = vpop.permute.xlu0 %543
      %v545 = vrot.slane %v538, 4
      %v546 = vrot.slane %v540, 4
      %v547 = vrot.slane %v542, 4
      %v548 = vrot.slane %v544, 4
      %v549 = vsel %vm303, %v545, %v546
      %vm550 = vcmask 736256
      %v551 = vsel %vm550, %v538, %v549
      %v552 = vsel %vm550, %v540, %v546
      %v553 = vsel %vm303, %v547, %v548
      %v554 = vsel %vm550, %v542, %v553
      %v555 = vsel %vm550, %v544, %v548
      %560 = vst [vmem:[#allocation2 + $0xc0] sm:$0xff] %v551
      %561 = vst [vmem:[#allocation2 + $0xc8] sm:$0xf] %v552
      %562 = vst [vmem:[#allocation2 + $0xcc] sm:$0xff] %v554
      %563 = vst [vmem:[#allocation2 + $0xd4] sm:$0xf] %v555
      %v564 = vld [vmem:[%s256] sm:$0xff]
      %v565 = vld [vmem:[#allocation2] sm:$0xff]
      %v566 = vld [vmem:[#allocation2 + $0x8] sm:$0xf]
      %v567 = vld [vmem:[#allocation2 + $0xc] sm:$0xff]
      %v568 = vld [vmem:[#allocation2 + $0x14] sm:$0xf]
      %v569 = vld [vmem:[#allocation2 + $0x18] sm:$0xff]
      %v570 = vld [vmem:[#allocation2 + $0x20] sm:$0xf]
      %v571 = vld [vmem:[#allocation2 + $0x24] sm:$0xff]
      %v572 = vld [vmem:[#allocation2 + $0x2c] sm:$0xf]
      %v573 = vld [vmem:[#allocation2 + $0x30] sm:$0xff]
      %v574 = vld [vmem:[#allocation2 + $0x38] sm:$0xf]
      %v575 = vld [vmem:[#allocation2 + $0x3c] sm:$0xff]
      %v576 = vld [vmem:[#allocation2 + $0x44] sm:$0xf]
      %v577 = vld [vmem:[#allocation2 + $0x48] sm:$0xff]
      %v578 = vld [vmem:[#allocation2 + $0x50] sm:$0xf]
      %v579 = vld [vmem:[#allocation2 + $0x54] sm:$0xff]
      %v580 = vld [vmem:[#allocation2 + $0x5c] sm:$0xf]
      %v581 = vld [vmem:[#allocation2 + $0x60] sm:$0xff]
      %v582 = vld [vmem:[#allocation2 + $0x68] sm:$0xf]
      %v583 = vld [vmem:[#allocation2 + $0x6c] sm:$0xff]
      %v584 = vld [vmem:[#allocation2 + $0x74] sm:$0xf]
      %v585 = vld [vmem:[#allocation2 + $0x78] sm:$0xff]
      %v586 = vld [vmem:[#allocation2 + $0x80] sm:$0xf]
      %v587 = vld [vmem:[#allocation2 + $0x84] sm:$0xff]
      %v588 = vld [vmem:[#allocation2 + $0x8c] sm:$0xf]
      %v589 = vld [vmem:[#allocation2 + $0x90] sm:$0xff]
      %v590 = vld [vmem:[#allocation2 + $0x98] sm:$0xf]
      %v591 = vld [vmem:[#allocation2 + $0x9c] sm:$0xff]
      %v592 = vld [vmem:[#allocation2 + $0xa4] sm:$0xf]
      %v593 = vld [vmem:[#allocation2 + $0xa8] sm:$0xff]
      %v594 = vld [vmem:[#allocation2 + $0xb0] sm:$0xf]
      %v595 = vld [vmem:[#allocation2 + $0xb4] sm:$0xff]
      %v596 = vld [vmem:[#allocation2 + $0xbc] sm:$0xf]
      %v597 = vld [vmem:[#allocation2 + $0xc0] sm:$0xff]
      %v598 = vld [vmem:[#allocation2 + $0xc8] sm:$0xf]
      %v599 = vld [vmem:[#allocation2 + $0xcc] sm:$0xff]
      %v600 = vld [vmem:[#allocation2 + $0xd4] sm:$0xf]
      %v602 = vunpack.c.l.b16 %v564
      %v603 = vunpack.c.h.b16 %v564
      %v604 = vpack.c.b16 %v602, %v602
      %v605 = vpack.c.b16 %v603, %v603
      %v643 = vunpack.c.l.b16 %v565
      %v644 = vunpack.c.h.b16 %v565
      %v645 = vunpack.c.l.b16 %v566
      %v646 = vunpack.c.l.b16 %v567
      %v647 = vunpack.c.h.b16 %v567
      %v648 = vunpack.c.l.b16 %v568
      %v649 = vunpack.c.l.b16 %v569
      %v650 = vunpack.c.h.b16 %v569
      %v651 = vunpack.c.l.b16 %v570
      %v652 = vunpack.c.l.b16 %v571
      %v653 = vunpack.c.h.b16 %v571
      %v654 = vunpack.c.l.b16 %v572
      %v655 = vunpack.c.l.b16 %v573
      %v656 = vunpack.c.h.b16 %v573
      %v657 = vunpack.c.l.b16 %v574
      %v658 = vunpack.c.l.b16 %v575
      %v659 = vunpack.c.h.b16 %v575
      %v660 = vunpack.c.l.b16 %v576
      %v661 = vunpack.c.l.b16 %v577
      %v662 = vunpack.c.h.b16 %v577
      %v663 = vunpack.c.l.b16 %v578
      %v664 = vunpack.c.l.b16 %v579
      %v665 = vunpack.c.h.b16 %v579
      %v666 = vunpack.c.l.b16 %v580
      %v667 = vunpack.c.l.b16 %v581
      %v668 = vunpack.c.h.b16 %v581
      %v669 = vunpack.c.l.b16 %v582
      %v670 = vunpack.c.l.b16 %v583
      %v671 = vunpack.c.h.b16 %v583
      %v672 = vunpack.c.l.b16 %v584
      %v673 = vunpack.c.l.b16 %v585
      %v674 = vunpack.c.h.b16 %v585
      %v675 = vunpack.c.l.b16 %v586
      %v676 = vunpack.c.l.b16 %v587
      %v677 = vunpack.c.h.b16 %v587
      %v678 = vunpack.c.l.b16 %v588
      %v679 = vunpack.c.l.b16 %v589
      %v680 = vunpack.c.h.b16 %v589
      %v681 = vunpack.c.l.b16 %v590
      %v682 = vunpack.c.l.b16 %v591
      %v683 = vunpack.c.h.b16 %v591
      %v684 = vunpack.c.l.b16 %v592
      %v685 = vunpack.c.l.b16 %v593
      %v686 = vunpack.c.h.b16 %v593
      %v687 = vunpack.c.l.b16 %v594
      %v688 = vunpack.c.l.b16 %v595
      %v689 = vunpack.c.h.b16 %v595
      %v690 = vunpack.c.l.b16 %v596
      %v691 = vunpack.c.l.b16 %v597
      %v692 = vunpack.c.h.b16 %v597
      %v693 = vunpack.c.l.b16 %v598
      %v694 = vunpack.c.l.b16 %v599
      %v695 = vunpack.c.h.b16 %v599
      %v696 = vunpack.c.l.b16 %v600
      %v697 = vpack.c.b16 %v646, %v643
      %v698 = vpack.c.b16 %v647, %v644
      %v699 = vpack.c.b16 %v648, %v645
      %v700 = vpack.c.b16 %v652, %v649
      %v701 = vpack.c.b16 %v653, %v650
      %v702 = vpack.c.b16 %v654, %v651
      %v703 = vpack.c.b16 %v658, %v655
      %v704 = vpack.c.b16 %v659, %v656
      %v705 = vpack.c.b16 %v660, %v657
      %v706 = vpack.c.b16 %v664, %v661
      %v707 = vpack.c.b16 %v665, %v662
      %v708 = vpack.c.b16 %v666, %v663
      %v709 = vpack.c.b16 %v670, %v667
      %v710 = vpack.c.b16 %v671, %v668
      %v711 = vpack.c.b16 %v672, %v669
      %v712 = vpack.c.b16 %v676, %v673
      %v713 = vpack.c.b16 %v677, %v674
      %v714 = vpack.c.b16 %v678, %v675
      %v715 = vpack.c.b16 %v682, %v679
      %v716 = vpack.c.b16 %v683, %v680
      %v717 = vpack.c.b16 %v684, %v681
      %v718 = vpack.c.b16 %v688, %v685
      %v719 = vpack.c.b16 %v689, %v686
      %v720 = vpack.c.b16 %v690, %v687
      %v721 = vpack.c.b16 %v694, %v691
      %v722 = vpack.c.b16 %v695, %v692
      %v723 = vpack.c.b16 %v696, %v693
      %vm751 = vcmask 130048
      %v753 = vsel %vm751, %v605, 0
      %755 = vmatpush.bf16.msra.mxu0 %v718
      %756 = vmatpush.bf16.msra.mxu0 %v715
      %757 = vmatpush.bf16.msra.mxu0 %v712
      %758 = vmatpush.bf16.msra.mxu0 %v709
      %759 = vmatpush.bf16.msra.mxu0 %v706
      %760 = vmatpush.bf16.msra.mxu0 %v703
      %761 = vmatpush.bf16.msra.mxu0 %v700
      %762 = vmatpush.bf16.msra.mxu0 %v697
      %763 = vmatmul.bf16.gmra.mxu0 %v604
      %v764 = vpop.f32.mrf.mxu0
      %v765 = vadd.f32 0.0, %v764
      %v766 = vpop.f32.mrf.mxu0
      %767 = vdwg.mxu0
      %768 = vmatpush.bf16.msra.mxu0 0
      %769 = vmatpush.bf16.msra.mxu0 0
      %770 = vmatpush.bf16.msra.mxu0 0
      %771 = vmatpush.bf16.msra.mxu0 0
      %772 = vmatpush.bf16.msra.mxu0 0
      %773 = vmatpush.bf16.msra.mxu0 0
      %774 = vmatpush.bf16.msra.mxu0 0
      %775 = vmatpush.bf16.msra.mxu0 %v721
      %776 = vmatmul.bf16.gmra.mxu0 %v753
      %v777 = vpop.f32.mrf.mxu0
      %v778 = vadd.f32 %v765, %v777
      %v779 = vpop.f32.mrf.mxu0
      %780 = vdwg.mxu0
      %781 = vmatpush.bf16.msra.mxu0 %v719
      %782 = vmatpush.bf16.msra.mxu0 %v716
      %783 = vmatpush.bf16.msra.mxu0 %v713
      %784 = vmatpush.bf16.msra.mxu0 %v710
      %785 = vmatpush.bf16.msra.mxu0 %v707
      %786 = vmatpush.bf16.msra.mxu0 %v704
      %787 = vmatpush.bf16.msra.mxu0 %v701
      %788 = vmatpush.bf16.msra.mxu0 %v698
      %789 = vmatmul.bf16.gmra.mxu0 %v604
      %v790 = vpop.f32.mrf.mxu0
      %v791 = vadd.f32 0.0, %v790
      %v792 = vpop.f32.mrf.mxu0
      %793 = vdwg.mxu0
      %794 = vmatpush.bf16.msra.mxu0 0
      %795 = vmatpush.bf16.msra.mxu0 0
      %796 = vmatpush.bf16.msra.mxu0 0
      %797 = vmatpush.bf16.msra.mxu0 0
      %798 = vmatpush.bf16.msra.mxu0 0
      %799 = vmatpush.bf16.msra.mxu0 0
      %800 = vmatpush.bf16.msra.mxu0 0
      %801 = vmatpush.bf16.msra.mxu0 %v722
      %802 = vmatmul.bf16.gmra.mxu0 %v753
      %v803 = vpop.f32.mrf.mxu0
      %v804 = vadd.f32 %v791, %v803
      %v805 = vpop.f32.mrf.mxu0
      %806 = vdwg.mxu0
      %807 = vmatpush.bf16.msra.mxu0 %v720
      %808 = vmatpush.bf16.msra.mxu0 %v717
      %809 = vmatpush.bf16.msra.mxu0 %v714
      %810 = vmatpush.bf16.msra.mxu0 %v711
      %811 = vmatpush.bf16.msra.mxu0 %v708
      %812 = vmatpush.bf16.msra.mxu0 %v705
      %813 = vmatpush.bf16.msra.mxu0 %v702
      %814 = vmatpush.bf16.msra.mxu0 %v699
      %815 = vmatmul.bf16.gmra.mxu0 %v604
      %v816 = vpop.f32.mrf.mxu0
      %v817 = vadd.f32 0.0, %v816
      %v818 = vpop.f32.mrf.mxu0
      %819 = vdwg.mxu0
      %820 = vmatpush.bf16.msra.mxu0 0
      %821 = vmatpush.bf16.msra.mxu0 0
      %822 = vmatpush.bf16.msra.mxu0 0
      %823 = vmatpush.bf16.msra.mxu0 0
      %824 = vmatpush.bf16.msra.mxu0 0
      %825 = vmatpush.bf16.msra.mxu0 0
      %826 = vmatpush.bf16.msra.mxu0 0
      %827 = vmatpush.bf16.msra.mxu0 %v723
      %828 = vmatmul.bf16.gmra.mxu0 %v753
      %v829 = vpop.f32.mrf.mxu0
      %v830 = vadd.f32 %v817, %v829
      %v831 = vpop.f32.mrf.mxu0
      %832 = vdwg.mxu0
      %v833 = vld [vmem:[%s260] sm:$0xff]
      %835 = vset.pattern.permute.xlu0 0
      %836 = vperm.xlu0 %835, %v833
      %v837 = vpop.permute.xlu0 %836
      %v839 = vmul.f32 %v778, %v837
      %v840 = vmul.f32 %v804, %v837
      %v841 = vmul.f32 %v830, %v837
      %v842 = vld [vmem:[%s264] sm:$0xff]
      %844 = vset.pattern.permute.xlu0 0
      %845 = vperm.xlu0 %844, %v842
      %v846 = vpop.permute.xlu0 %845
      %v848 = vadd.f32 %v839, %v846
      %v849 = vadd.f32 %v840, %v846
      %v850 = vadd.f32 %v841, %v846
      %v851 = vmax.f32 %v848, 0.0
      %v852 = vmax.f32 %v849, 0.0
      %v853 = vmax.f32 %v850, 0.0
      %v854 = vpack.c.bf16 %v852, %v851
      %v855 = vpack.c.bf16 %v853, %v853
      %856 = vst [vmem:[%s273] sm:$0xff] %v854
      %857 = vst [vmem:[%s273 + $0x8] sm:$0xf] %v855
      %p858 = scmp.lt.s32.totalorder %s19, 1
      %s859 = scalar_select %p858, %s19, 1
      %p860 = scmp.lt.s32.totalorder %s20, 0
      %s861 = scalar_select %p860, %s20, 0
      %s862 = smul.addr %s861, 3
      %s863 = smul.addr %s859, 3
      %s864 = sadd.s32 %s862, %s863
      %s865 = smul.addr %s864, 4
      %s866 = scalar_lea.vmem %s4, %s865
      // Predicated region
      $region37: #{conv2d_bn_activ.1} parent=35 // pred_check
        %p867 = pneg %p151
      $region38: #{conv2d_bn_activ.1} parent=35 // pred_check_branch
        %869 = sbr.rel (%p867) target = $region40
      $region39: #{conv2d_bn_activ.1} parent=35 // pred_region
        _
      $region40: #{conv2d_bn_activ.1} parent=35 // pred_fallthru
        _
    $region36: #{conv2d_bn_activ.1} parent=5 // pred_fallthru
      _
    %p870 = scmp.le.s32.totalorder 2, %s10
    // Predicated region
    $region41: #{conv2d_bn_activ.1} parent=5 // pred_check
      %p871 = pneg %p870
    $region42: #{conv2d_bn_activ.1} parent=5 // pred_check_branch
      %873 = sbr.rel (%p871) target = $region44
    $region43: #{conv2d_bn_activ.1} parent=5 // pred_region
      %s874 = ssub.s32 %s10, 2
      // Predicated region
      $region45: #{conv2d_bn_activ.1} parent=43 // pred_check
        %p875 = pneg %p157
      $region46: #{conv2d_bn_activ.1} parent=43 // pred_check_branch
        %877 = sbr.rel (%p875) target = $region48
      $region47: #{conv2d_bn_activ.1} parent=43 // pred_region
        %p878 = scmp.lt.s32.totalorder %s21, 1
        %s879 = scalar_select %p878, %s21, 1
        %p880 = scmp.lt.s32.totalorder %s22, 0
        %s881 = scalar_select %p880, %s22, 0
        %s882 = smul.addr %s881, 3
        %s883 = smul.addr %s879, 3
        %s884 = sadd.s32 %s882, %s883
        %s885 = smul.addr %s884, 4
        %s886 = scalar_lea.vmem %s4, %s885
      $region48: #{conv2d_bn_activ.1} parent=43 // pred_fallthru
        _
    $region44: #{conv2d_bn_activ.1} parent=5 // pred_fallthru
      _
  $region6: #{conv2d_bn_activ.1} parent=0 // loop_footer
    %s14 = sadd.s32 1, %s10
  $region7: #{conv2d_bn_activ.1} parent=0 // loop_footer_branch
    %9 = sbr.rel target = $region3
  $region8: #{conv2d_bn_activ.1} parent=0 // loop_exit
    _

</llo_original>
